<compile_context>
chip_gen: v7x
topology: tpu7x:2x2x1
jax: 0.10.0
libtpu: 0.0.40
codegen_flags: <defaults>
</compile_context>

<pallas_src>
import jax
import jax.numpy as jnp
from jax.experimental import pallas as pl
from jax.experimental.pallas import tpu as pltpu

# ----------------- small-scale configuration (stand-ins for ResNet-50 sized dims) -----------------
N_CLASSES   = 5
C_BASE      = 32     # stands in for dout_base_model = 1024
C_TOP       = 64     # stands in for 2048
MEM_C       = 16     # stands in for args.MEM_C = 512
FC_DIM      = 32     # stands in for 4096
POOL        = 7      # pre_pool_size
FEAT_STRIDE = 16.0
MEM_ITER    = 3
MEM_BETA    = 0.25

VMEM_LIMIT  = 32 * 1024 * 1024   # scoped-VMEM budget (usage here is << 1 MiB per kernel)


def _round_up(x, m):
    return ((x + m - 1) // m) * m


def _full_spec(a):
    """BlockSpec covering the whole array as a single block (grid=(1,))."""
    nd = a.ndim
    return pl.BlockSpec(tuple(a.shape), lambda i, _nd=nd: (0,) * _nd)


# ================================ host-side layout helpers ================================
def _pad_flat_ext(x, Wp):
    """(N,H,W,C) -> (N, (H+3)*Wp, C) bf16: 1 top / 2 bottom pad rows, 1 left pad col, right-pad to
    Wp columns, flattened.  This 'extended padded' layout lets every 3x3 tap be a static slice of
    length H*Wp without running off the buffer."""
    N, H, W, C = x.shape
    xp = jnp.pad(x, ((0, 0), (1, 2), (1, Wp - W - 1), (0, 0))).astype(jnp.bfloat16)
    return xp.reshape(N, (H + 3) * Wp, C)


def _pad_flat_row(x, Wp):
    """(N,H,W,C) -> (N, H*Wp, C) bf16 'row-slab' layout (right-pad columns are zero)."""
    N, H, W, C = x.shape
    xp = jnp.pad(x, ((0, 0), (0, 0), (0, Wp - W, ), (0, 0))).astype(jnp.bfloat16)
    return xp.reshape(N, H * Wp, C)


def _unslab(y, H, W, Wp):
    """(N, H*Wp, C) row-slab -> (N,H,W,C): strip the garbage columns with one XLA slice."""
    N, _, C = y.shape
    return y.reshape(N, H, Wp, C)[:, :, :W, :]


# ================================ in-kernel conv helpers ================================
def _col_mask(Wp, W, Lfull):
    """(Lfull, 1) bool mask of valid output columns in the row-slab layout."""
    idx = jax.lax.broadcasted_iota(jnp.int32, (Lfull, 1), 0)
    return (idx % Wp) < W


def _conv3x3_taps(xpad, w, b, Wp, Lfull):
    """3x3 / stride-1 / pad-1 conv on the flattened extended-padded layout.
    xpad: (N, Lfull+3*Wp, Cin) value;  w: (9*Cin, Cout) bf16, tap-major;  b: (1, Cout) f32.
    The 9 shifted tap slices are concatenated along the contraction axis so the whole conv is a
    single K=9*Cin MXU matmul.  Returns (N, Lfull, Cout) f32 row-slab (cols >= W are garbage)."""
    N, _, Cin = xpad.shape
    taps = [xpad[:, kh * Wp + kw: kh * Wp + kw + Lfull, :].reshape(N * Lfull, Cin)
            for kh in range(3) for kw in range(3)]
    lhs = jnp.concatenate(taps, axis=-1).astype(jnp.bfloat16)          # (N*Lfull, 9*Cin)
    y = jnp.dot(lhs, w, preferred_element_type=jnp.float32)
    if b is not None:
        y = y + b
    return y.reshape(N, Lfull, w.shape[-1])


def _repad(y, mask, Wp):
    """Row-slab (N, Lfull, C) f32 -> extended-padded (N, Lfull+3*Wp, C) f32 with a zero pad ring,
    ready for the next _conv3x3_taps.  Stays in VMEM/vregs; never touches HBM."""
    N, Lfull, C = y.shape
    y = jnp.where(mask, y, 0.0)
    top = jnp.zeros((N, Wp + 1, C), y.dtype)
    bot = jnp.zeros((N, 2 * Wp - 1, C), y.dtype)
    return jnp.concatenate([top, y, bot], axis=1)


# ================================ Pallas kernel 1: fused context ================================
def _make_context_kernel(Wp, W, Lfull):
    def kernel(x_ref, w1_ref, b1_ref, w2_ref, b2_ref, w3_ref, b3_ref, o_ref):
        mask = _col_mask(Wp, W, Lfull)
        x = x_ref[...].astype(jnp.float32)
        res1 = _conv3x3_taps(x, w1_ref[...], b1_ref[...], Wp, Lfull)
        h = _repad(jnp.maximum(res1, 0.0), mask, Wp)
        h = jnp.maximum(_conv3x3_taps(h, w2_ref[...], b2_ref[...], Wp, Lfull), 0.0)
        h = _repad(h, mask, Wp)
        res2 = _conv3x3_taps(h, w3_ref[...], b3_ref[...], Wp, Lfull)
        o_ref[...] = res1 + res2
    return kernel


def fused_context(mem, p):
    """_context(mem): three chained 3x3 convs + residual add in a single pallas_call."""
    N, H, W, C = mem.shape
    Wp = _round_up(W + 2, 16)
    Lfull = H * Wp

    def rw(name):
        w = p[name]["w"]
        return w.reshape(-1, w.shape[-1]).astype(jnp.bfloat16)

    def rb(name):
        return p[name]["b"].reshape(1, -1).astype(jnp.float32)

    ops = [_pad_flat_ext(mem, Wp),
           rw("ctx_n1"), rb("ctx_n1"),
           rw("ctx_n2a"), rb("ctx_n2a"),
           rw("ctx_n2b"), rb("ctx_n2b")]

    # TODO(synk): grid=(1,) leaves v7x's second TensorCore idle for this kernel; splitting the
    #             Lfull axis across 2 parallel grid steps would need halo exchange (not worth it
    #             at an 8x8x16 memory).
    out = pl.pallas_call(
        _make_context_kernel(Wp, W, Lfull),
        out_shape=jax.ShapeDtypeStruct((N, Lfull, C), jnp.float32),
        grid=(1,),
        in_specs=[_full_spec(a) for a in ops],
        out_specs=pl.BlockSpec((N, Lfull, C), lambda i: (0, 0, 0)),
        compiler_params=pltpu.CompilerParams(dimension_semantics=("arbitrary",),
                                             vmem_limit_bytes=VMEM_LIMIT),
    )(*ops)
    return _unslab(out, H, W, Wp)


# ================================ Pallas kernel 2: fused GRU / _mem_handle ================================
def _make_gru_kernel(Wp, W, Lfull, mem_c):
    def kernel(p5mem_ref, p5nb_ref, cls_ref,
               wbtf_ref, bbtf_ref, wbtc_ref, bbtc_ref,
               win_ref, bin_ref, wp_ref, bp_ref, wm_ref, bm_ref, wmi_ref, bmi_ref,
               o_ref):
        mask = _col_mask(Wp, W, Lfull)
        NB = p5mem_ref.shape[0]

        p5mem_pad = p5mem_ref[...].astype(jnp.float32)          # (NB, Lfull+3Wp, MEM_C)
        p5mem = p5mem_pad[:, Wp + 1: Wp + 1 + Lfull, :]         # row-slab view of pool5_mem

        # _bottomtop: map_prob = bt_fc(cls_score_nb);  pool5_comp = 1x1 bt_conv(pool5_nb)
        map_prob = jnp.dot(cls_ref[...], wbtf_ref[...],
                           preferred_element_type=jnp.float32) + bbtf_ref[...]     # (NB, MEM_C)
        p5nb = p5nb_ref[...]                                                        # (NB, Lfull, C_BASE)
        comp = jnp.dot(p5nb.reshape(NB * Lfull, p5nb.shape[-1]), wbtc_ref[...],
                       preferred_element_type=jnp.float32) + bbtc_ref[...]
        comb = jnp.maximum(comp.reshape(NB, Lfull, mem_c) + map_prob[:, None, :], 0.0)

        # _input: 3x3 conv + relu (intermediate re-padded in-register, never leaves VMEM)
        p5in = jnp.maximum(
            _conv3x3_taps(_repad(comb, mask, Wp), win_ref[...], bin_ref[...], Wp, Lfull), 0.0)

        # p-gates fused into one Cout=MEM_C+2 conv; m-gates fused into one Cout=2 conv
        p_all = _conv3x3_taps(_repad(p5in, mask, Wp), wp_ref[...], bp_ref[...], Wp, Lfull)
        m_all = _conv3x3_taps(p5mem_pad, wm_ref[...], bm_ref[...], Wp, Lfull)
        p_input = p_all[..., :mem_c]
        p_reset = p_all[..., mem_c:mem_c + 1]
        p_update = p_all[..., mem_c + 1:mem_c + 2]
        m_reset = m_all[..., 0:1]
        m_update = m_all[..., 1:2]

        # GRU update (all element-wise math fused; narrow gate tensors never hit HBM)
        reset_res = p5mem * jax.nn.sigmoid(p_reset + m_reset)
        m_input = _conv3x3_taps(_repad(reset_res, mask, Wp), wmi_ref[...], bmi_ref[...], Wp, Lfull)
        pool5_new = jnp.maximum(p_input + m_input, 0.0)
        update_gate = jax.nn.sigmoid(p_update + m_update)
        o_ref[...] = update_gate * (pool5_new - p5mem)
    return kernel


def fused_mem_gru(pool5_mem, pool5_nb, cls_score_nb, p):
    """_input_module + _mem_update fused into a single pallas_call over all NB boxes."""
    NB, H, W, C = pool5_mem.shape                      # (NB, 7, 7, MEM_C)
    CB = pool5_nb.shape[-1]
    Wp = _round_up(W + 2, 16)
    Lfull = H * Wp

    w_p = jnp.concatenate([p["gate_p_input"]["w"], p["gate_p_reset"]["w"],
                           p["gate_p_update"]["w"]], axis=-1)
    b_p = jnp.concatenate([p["gate_p_input"]["b"], p["gate_p_reset"]["b"],
                           p["gate_p_update"]["b"]])
    w_m = jnp.concatenate([p["gate_m_reset"]["w"], p["gate_m_update"]["w"]], axis=-1)
    b_m = jnp.concatenate([p["gate_m_reset"]["b"], p["gate_m_update"]["b"]])

    def rw(w): return w.reshape(-1, w.shape[-1]).astype(jnp.bfloat16)
    def rb(b): return b.reshape(1, -1).astype(jnp.float32)

    ops = [_pad_flat_ext(pool5_mem, Wp),               # (NB, Lfull+3Wp, MEM_C) bf16
           _pad_flat_row(pool5_nb, Wp),                # (NB, Lfull, C_BASE)    bf16
           cls_score_nb.astype(jnp.bfloat16),          # (NB, N_CLASSES)
           p["bt_fc"]["w"].astype(jnp.bfloat16), rb(p["bt_fc"]["b"]),
           p["bt_conv"]["w"].reshape(CB, C).astype(jnp.bfloat16), rb(p["bt_conv"]["b"]),
           rw(p["input_conv"]["w"]), rb(p["input_conv"]["b"]),
           rw(w_p), rb(b_p), rw(w_m), rb(b_m),
           rw(p["gate_m_input"]["w"]), rb(p["gate_m_input"]["b"])]

    mem_diff = pl.pallas_call(
        _make_gru_kernel(Wp, W, Lfull, C),
        out_shape=jax.ShapeDtypeStruct((NB, Lfull, C), jnp.float32),
        grid=(1,),
        in_specs=[_full_spec(a) for a in ops],
        out_specs=pl.BlockSpec((NB, Lfull, C), lambda i: (0, 0, 0)),
        compiler_params=pltpu.CompilerParams(dimension_semantics=("arbitrary",),
                                             vmem_limit_bytes=VMEM_LIMIT),
    )(*ops)
    return _unslab(mem_diff, H, W, Wp)


# ================================ Pallas kernel 3: fused FC head ================================
def _fc_head_kernel(x_ref, w1_ref, b1_ref, w2_ref, b2_ref, wc_ref, bc_ref, wf_ref, bf_ref,
                    cls_ref, conf_ref):
    h = jnp.dot(x_ref[...], w1_ref[...], preferred_element_type=jnp.float32) + b1_ref[...]
    h = jnp.maximum(h, 0.0).astype(jnp.bfloat16)
    h = jnp.dot(h, w2_ref[...], preferred_element_type=jnp.float32) + b2_ref[...]
    h = jnp.maximum(h, 0.0).astype(jnp.bfloat16)
    cls_ref[...] = jnp.dot(h, wc_ref[...], preferred_element_type=jnp.float32) + bc_ref[...]
    conf_ref[...] = jnp.dot(h, wf_ref[...], preferred_element_type=jnp.float32) + bf_ref[...]


def fused_fc_head(flat, p):
    """fc_iter1 -> relu -> fc_iter2 -> relu -> {cls_iter, conf_iter} in one pallas_call."""
    NB = flat.shape[0]
    ops = [flat.astype(jnp.bfloat16),
           p["fc_iter1"]["w"].astype(jnp.bfloat16), p["fc_iter1"]["b"].reshape(1, -1),
           p["fc_iter2"]["w"].astype(jnp.bfloat16), p["fc_iter2"]["b"].reshape(1, -1),
           p["cls_iter"]["w"].astype(jnp.bfloat16), p["cls_iter"]["b"].reshape(1, -1),
           p["conf_iter"]["w"].astype(jnp.bfloat16), p["conf_iter"]["b"].reshape(1, -1)]
    cls, conf = pl.pallas_call(
        _fc_head_kernel,
        out_shape=(jax.ShapeDtypeStruct((NB, N_CLASSES), jnp.float32),
                   jax.ShapeDtypeStruct((NB, 1), jnp.float32)),
        grid=(1,),
        in_specs=[_full_spec(a) for a in ops],
        out_specs=(pl.BlockSpec((NB, N_CLASSES), lambda i: (0, 0)),
                   pl.BlockSpec((NB, 1), lambda i: (0, 0))),
        compiler_params=pltpu.CompilerParams(dimension_semantics=("arbitrary",),
                                             vmem_limit_bytes=VMEM_LIMIT),
    )(*ops)
    return cls, conf


# ================================ Pallas: small linear (one-time heads) ================================
def pallas_linear(x, w, b, relu=False):
    """y = relu?(x @ w + b); single full block (M=NB=3 here), bf16 MXU operands, f32 accumulate.
    TODO(synk): at real channel widths (1024/2048/4096) this needs (TM,TK,TN) grid blocking with
                an f32 accumulator scratch so tiles fit v7x's 64 MiB VMEM (and ~2x larger tiles on
                v5e/v6e's 128 MiB); at the toy widths a single block per call is optimal."""
    M, K = x.shape
    N = w.shape[-1]

    def kernel(x_ref, w_ref, b_ref, o_ref):
        y = jnp.dot(x_ref[...], w_ref[...], preferred_element_type=jnp.float32) + b_ref[...]
        if relu:
            y = jnp.maximum(y, 0.0)
        o_ref[...] = y

    return pl.pallas_call(
        kernel,
        out_shape=jax.ShapeDtypeStruct((M, N), jnp.float32),
        grid=(1,),
        in_specs=[pl.BlockSpec((M, K), lambda i: (0, 0)),
                  pl.BlockSpec((K, N), lambda i: (0, 0)),
                  pl.BlockSpec((1, N), lambda i: (0, 0))],
        out_specs=pl.BlockSpec((M, N), lambda i: (0, 0)),
        compiler_params=pltpu.CompilerParams(dimension_semantics=("arbitrary",),
                                             vmem_limit_bytes=VMEM_LIMIT),
    )(x.astype(jnp.bfloat16), w.astype(jnp.bfloat16), b.reshape(1, N).astype(jnp.float32))


# ================================ backbone stand-in ================================
def backbone_conv3x3_s2(x, w, b):
    """3x3 / stride-2 / pad-1 conv + ReLU.
    TODO(synk): stand-in for the frozen pretrained ResNet-50 Conv_base / Conv_top; kept on XLA's
                native conv (no HBM im2col materialisation, per perf review) rather than Pallas."""
    y = jax.lax.conv_general_dilated(x.astype(jnp.float32), w, window_strides=(2, 2),
                                     padding=((1, 1), (1, 1)),
                                     dimension_numbers=("NHWC", "HWIO", "NHWC"))
    return jnp.maximum(y + b, 0.0)


# ================================ plain-JAX glue ================================
def compute_target_memory(memory_size, gt_boxes, feat_stride):
    minus_h = memory_size[0] - 1.0
    minus_w = memory_size[1] - 1.0
    x1 = gt_boxes[:, 0:1] / feat_stride
    y1 = gt_boxes[:, 1:2] / feat_stride
    x2 = gt_boxes[:, 2:3] / feat_stride
    y2 = gt_boxes[:, 3:4] / feat_stride
    rois = jnp.concatenate([y1 / minus_h, x1 / minus_w, y2 / minus_h, x2 / minus_w], axis=1)
    dy = jnp.maximum(y2 - y1, 1e-14)
    dx = jnp.maximum(x2 - x1, 1e-14)
    inv_rois = jnp.concatenate([(0.0 - y1) / dy, (0.0 - x1) / dx,
                                (minus_h - y1) / dy, (minus_w - x1) / dx], axis=1)
    return rois, inv_rois


def crop_and_resize(image, boxes, box_ind, crop_h, crop_w, extrapolation_value=0.0):
    """TF-style CropAndResize on NHWC images; boxes are normalized [y1,x1,y2,x2].
    TODO(synk): data-dependent bilinear gather stays in plain JAX (not a Pallas hot path)."""
    B, H, W, C = image.shape
    N = boxes.shape[0]
    y1, x1, y2, x2 = boxes[:, 0], boxes[:, 1], boxes[:, 2], boxes[:, 3]
    if crop_h > 1:
        ys = y1[:, None] * (H - 1) + jnp.arange(crop_h, dtype=jnp.float32)[None, :] * \
             ((y2 - y1) * (H - 1) / (crop_h - 1))[:, None]
    else:
        ys = 0.5 * (y1 + y2)[:, None] * (H - 1)
    if crop_w > 1:
        xs = x1[:, None] * (W - 1) + jnp.arange(crop_w, dtype=jnp.float32)[None, :] * \
             ((x2 - x1) * (W - 1) / (crop_w - 1))[:, None]
    else:
        xs = 0.5 * (x1 + x2)[:, None] * (W - 1)
    imgs = image[box_ind]                                           # (N,H,W,C)
    y_ok = (ys >= 0.0) & (ys <= H - 1.0)
    x_ok = (xs >= 0.0) & (xs <= W - 1.0)
    ysc = jnp.clip(ys, 0.0, H - 1.0)
    xsc = jnp.clip(xs, 0.0, W - 1.0)
    y0 = jnp.floor(ysc); x0 = jnp.floor(xsc)
    ly = ysc - y0; lx = xsc - x0
    y0i = y0.astype(jnp.int32); y1i = jnp.clip(y0i + 1, 0, H - 1)
    x0i = x0.astype(jnp.int32); x1i = jnp.clip(x0i + 1, 0, W - 1)
    n_idx = jnp.arange(N)[:, None, None]

    def g(yi, xi):
        return imgs[n_idx, yi[:, :, None], xi[:, None, :], :]       # (N,ch,cw,C)

    v00, v01, v10, v11 = g(y0i, x0i), g(y0i, x1i), g(y1i, x0i), g(y1i, x1i)
    lyb = ly[:, :, None, None]; lxb = lx[:, None, :, None]
    top = v00 * (1 - lxb) + v01 * lxb
    bot = v10 * (1 - lxb) + v11 * lxb
    out = top * (1 - lyb) + bot * lyb
    mask = (y_ok[:, :, None] & x_ok[:, None, :])[:, :, :, None]
    return jnp.where(mask, out, extrapolation_value)


def _cross_entropy_mean(logits, labels):
    logp = jax.nn.log_softmax(logits, axis=-1)
    return jnp.mean(-logp[jnp.arange(labels.shape[0]), labels])


# ================================ parameters ================================
def _conv_param(key, kh, kw, cin, cout):
    w = jax.random.normal(key, (kh, kw, cin, cout), jnp.float32) / jnp.sqrt(kh * kw * cin)
    return {"w": w, "b": jnp.zeros((cout,), jnp.float32)}


def _lin_param(key, cin, cout):
    w = jax.random.normal(key, (cin, cout), jnp.float32) / jnp.sqrt(cin)
    return {"w": w, "b": jnp.zeros((cout,), jnp.float32)}


def init_params(key):
    ks = iter(jax.random.split(key, 32))
    p = {}
    # TODO(synk): pretrained ResNet-50 Conv_base / Conv_top replaced by small strided-conv stand-ins.
    p["base1"] = _conv_param(next(ks), 3, 3, 3, 8)
    p["base2"] = _conv_param(next(ks), 3, 3, 8, 16)
    p["base3"] = _conv_param(next(ks), 3, 3, 16, 24)
    p["base4"] = _conv_param(next(ks), 3, 3, 24, C_BASE)
    p["top"]   = _conv_param(next(ks), 3, 3, C_BASE, C_TOP)
    p["cls_init"]   = _lin_param(next(ks), C_TOP, N_CLASSES)
    p["ctx_n1"]     = _conv_param(next(ks), 3, 3, MEM_C, MEM_C)
    p["ctx_n2a"]    = _conv_param(next(ks), 3, 3, MEM_C, MEM_C)
    p["ctx_n2b"]    = _conv_param(next(ks), 3, 3, MEM_C, MEM_C)
    p["fc_iter1"]   = _lin_param(next(ks), MEM_C * POOL * POOL, FC_DIM)
    p["fc_iter2"]   = _lin_param(next(ks), FC_DIM, FC_DIM)
    p["cls_iter"]   = _lin_param(next(ks), FC_DIM, N_CLASSES)
    p["conf_cls"]   = _lin_param(next(ks), C_BASE, 1)
    p["conf_iter"]  = _lin_param(next(ks), FC_DIM, 1)
    p["bt_fc"]      = _lin_param(next(ks), N_CLASSES, MEM_C)
    p["bt_conv"]    = _conv_param(next(ks), 1, 1, C_BASE, MEM_C)
    p["input_conv"] = _conv_param(next(ks), 3, 3, MEM_C, MEM_C)
    p["gate_p_input"]  = _conv_param(next(ks), 3, 3, MEM_C, MEM_C)
    p["gate_p_reset"]  = _conv_param(next(ks), 3, 3, MEM_C, 1)
    p["gate_p_update"] = _conv_param(next(ks), 3, 3, MEM_C, 1)
    p["gate_m_reset"]  = _conv_param(next(ks), 3, 3, MEM_C, 1)
    p["gate_m_update"] = _conv_param(next(ks), 3, 3, MEM_C, 1)
    p["gate_m_input"]  = _conv_param(next(ks), 3, 3, MEM_C, MEM_C)
    return p


# ================================ model pieces ================================
def _mem_pred(params, preds, mem, conf_cls, cls_score_conv, rois, zero_ind, it):
    mem_net = fused_context(mem, params)                                   # pallas kernel 1
    mem_ct_pool5 = crop_and_resize(mem_net, rois, zero_ind, POOL, POOL)    # (NB,7,7,MEM_C)
    flat = mem_ct_pool5.reshape(mem_ct_pool5.shape[0], -1)
    cls_score_mem, conf_iter = fused_fc_head(flat, params)                 # pallas kernel 3
    preds["confid"].append(conf_cls if it == 0 else conf_iter)
    cls_score = cls_score_conv if it == 0 else cls_score_mem
    cls_prob = jax.nn.softmax(cls_score, axis=-1)                          # tiny head: plain jnp
    preds["cls_score"].append(cls_score)
    return cls_score, cls_prob


def _mem_handle(params, mem, pool5_nb, cls_score, rois, inv_rois, zero_ind, count_eps, mh, mw):
    cls_score_nb = jax.lax.stop_gradient(cls_score)
    pool5_mem = crop_and_resize(mem, rois, zero_ind, POOL, POOL)           # (NB,7,7,MEM_C)
    mem_diff = fused_mem_gru(pool5_mem, pool5_nb, cls_score_nb, params)    # pallas kernel 2
    # _inv_crops (box_ind all zeros, exactly as in the reference implementation)
    inv_crops_all = crop_and_resize(mem_diff, inv_rois, zero_ind, mh, mw)  # (NB,mh,mw,MEM_C)
    mem_div = jnp.sum(inv_crops_all, axis=0) / count_eps
    return mem + mem_div


def _update_weights(labels, cls_prob, beta):
    num_gt = labels.shape[0]
    cls_score = cls_prob[jnp.arange(num_gt), labels]
    big_ones = cls_score >= (1.0 - beta)
    weights = 1.0 - cls_score
    # replicate the reference quirk: boolean mask is cast to an integer *index* tensor
    weights = weights.at[big_ones.astype(jnp.int32)].set(beta)
    weights = weights / jnp.maximum(jnp.sum(weights), 1e-14)
    return weights.reshape(-1)


def forward(params, im_data, im_info, gt_boxes, memory_size):
    preds = {"cls_score": [], "confid": [], "weights": []}
    mh = int(memory_size[0][0]); mw = int(memory_size[0][1])
    gt = gt_boxes[0].astype(jnp.float32)
    NB = gt.shape[0]
    zero_ind = jnp.zeros((NB,), jnp.int32)      # CropAndResizeFunction box_ind (all zeros)

    # Conv_base stand-in (feat_stride 16): frozen backbone -> XLA native convs (no Pallas)
    x = jnp.transpose(im_data, (0, 2, 3, 1)).astype(jnp.float32)   # NCHW -> NHWC
    for name in ("base1", "base2", "base3", "base4"):
        x = backbone_conv3x3_s2(x, params[name]["w"], params[name]["b"])
    base_feat = x                                                   # (1, H/16, W/16, C_BASE)

    rois, inv_rois = compute_target_memory((float(mh), float(mw)), gt, FEAT_STRIDE)

    pool5 = crop_and_resize(base_feat, rois, zero_ind, POOL, POOL)
    pool5_nb = jax.lax.stop_gradient(pool5)

    count_base = jnp.ones((1, POOL, POOL, 1), jnp.float32)
    count_crops = crop_and_resize(count_base, inv_rois, zero_ind, mh, mw)
    count_eps = jnp.maximum(jnp.sum(count_crops, axis=0), 1e-14)

    # _head_to_tail + _cls_init (one-time)
    top = backbone_conv3x3_s2(pool5, params["top"]["w"], params["top"]["b"])
    fc7 = jnp.mean(top, axis=(1, 2))
    cls_score_conv = pallas_linear(fc7, params["cls_init"]["w"], params["cls_init"]["b"])
    # loop-invariant confidence head for iteration 0 (computed once, not per iteration)
    conf_cls = pallas_linear(jnp.mean(pool5_nb, axis=(1, 2)),
                             params["conf_cls"]["w"], params["conf_cls"]["b"])

    labels = gt_boxes[:, :, -1].reshape(-1).astype(jnp.int32)

    mem = jnp.zeros((1, mh, mw, MEM_C), jnp.float32)                # _mem_init
    for it in range(MEM_ITER):
        cls_score, cls_prob = _mem_pred(params, preds, mem, conf_cls,
                                        cls_score_conv, rois, zero_ind, it)
        if it == MEM_ITER - 1:
            break
        mem = _mem_handle(params, mem, pool5_nb, cls_score, rois, inv_rois,
                          zero_ind, count_eps, mh, mw)
        preds["weights"].append(_update_weights(labels, cls_prob, MEM_BETA))

    # _aggregate_pred (tiny heads: plain jnp softmax)
    comb_confid = jnp.stack(preds["confid"], axis=2)                # (NB,1,T)
    comb_attend = jax.nn.softmax(comb_confid, axis=-1)
    comb_score = jnp.stack(preds["cls_score"], axis=2)              # (NB,NC,T)
    attend_cls_score = jnp.sum(comb_score * comb_attend, axis=2)
    attend_cls_prob = jax.nn.softmax(attend_cls_score, axis=-1)

    # losses (F.cross_entropy default 'mean' reduction, exactly as written in the reference)
    ces = []
    for it in range(MEM_ITER):
        ce_ins = _cross_entropy_mean(preds["cls_score"][it], labels)
        if it > 0:
            ce = jnp.sum(preds["weights"][it - 1] * ce_ins)
        else:
            ce = jnp.mean(ce_ins)
        ces.append(ce)
    ce_final = jnp.mean(_cross_entropy_mean(attend_cls_score, labels))
    ce_image = ces[0]
    ce_memory = jnp.mean(jnp.stack(ces[1:]))
    total_loss = ce_image + 1.0 * ce_memory + 1.0 * ce_final

    cls_prob_out = attend_cls_prob.reshape(rois.shape[0], -1)
    return cls_prob_out, total_loss, ce_image, ce_memory, ce_final


# ================================ demo ================================
if __name__ == "__main__":
    key = jax.random.PRNGKey(0)
    kp, kd = jax.random.split(key)
    params = init_params(kp)

    im_data = jax.random.normal(kd, (1, 3, 128, 128), jnp.float32) * 0.5      # NCHW
    im_info = jnp.array([[128.0, 128.0, 1.0]], jnp.float32)
    gt_boxes = jnp.array([[[16.0, 16.0, 80.0, 96.0, 1.0],
                           [32.0, 48.0, 112.0, 112.0, 2.0],
                           [8.0, 64.0, 72.0, 112.0, 3.0]]], jnp.float32)      # (1, N_GT, 5)
    memory_size = jnp.array([[8.0, 8.0]], jnp.float32)

    outs = forward(params, im_data, im_info, gt_boxes, memory_size)
    outs = jax.block_until_ready(outs)
    cls_prob, total_loss, ce_img, ce_mem, ce_final = outs

    assert cls_prob.shape == (3, N_CLASSES)
    assert all(bool(jnp.isfinite(o).all()) for o in outs)
    print("KERNEL_OK")
</pallas_src>

<mosaic_0001>
module attributes {stable_mosaic.version = 11 : i64} {
  func.func @kernel(%arg0: i32, %arg1: memref<3x64xbf16, #tpu.memory_space<vmem>>, %arg2: memref<64x5xbf16, #tpu.memory_space<vmem>>, %arg3: memref<1x5xf32, #tpu.memory_space<vmem>>, %arg4: memref<3x5xf32, #tpu.memory_space<vmem>>) attributes {dimension_semantics = [#tpu.dimension_semantics<arbitrary>], iteration_bounds = array<i64: 1>, scalar_prefetch = 0 : i64, scratch_operands = 0 : i64, tpu.core_type = #tpu.core_type<tc>, window_params = [{pipeline_mode = #tpu.pipeline_mode<synchronous>, transform_indices = @transform_0, window_bounds = array<i64: 3, 64>}, {pipeline_mode = #tpu.pipeline_mode<synchronous>, transform_indices = @transform_1, window_bounds = array<i64: 64, 5>}, {pipeline_mode = #tpu.pipeline_mode<synchronous>, transform_indices = @transform_2, window_bounds = array<i64: 1, 5>}, {pipeline_mode = #tpu.pipeline_mode<synchronous>, transform_indices = @transform_3, window_bounds = array<i64: 3, 5>}]} {
    %c0 = arith.constant 0 : index
    %c0_0 = arith.constant 0 : index
    %0 = vector.load %arg1[%c0, %c0_0] : memref<3x64xbf16, #tpu.memory_space<vmem>>, vector<3x64xbf16>
    %c0_1 = arith.constant 0 : index
    %c0_2 = arith.constant 0 : index
    %1 = vector.load %arg2[%c0_1, %c0_2] : memref<64x5xbf16, #tpu.memory_space<vmem>>, vector<64x5xbf16>
    %cst = arith.constant dense<0.000000e+00> : vector<3x5xf32>
    %2 = tpu.matmul %0, %1, %cst {dimension_numbers = #tpu.dot_dimension_numbers<[1], [0], [0], [1], [0, 0, 1, 1], [], []>} : vector<3x64xbf16>, vector<64x5xbf16>, vector<3x5xf32> -> vector<3x5xf32>
    %c0_3 = arith.constant 0 : index
    %c0_4 = arith.constant 0 : index
    %3 = vector.load %arg3[%c0_3, %c0_4] : memref<1x5xf32, #tpu.memory_space<vmem>>, vector<1x5xf32>
    %4 = vector.broadcast %3 : vector<1x5xf32> to vector<3x5xf32>
    %5 = arith.addf %2, %4 : vector<3x5xf32>
    %c0_5 = arith.constant 0 : index
    %c0_6 = arith.constant 0 : index
    %6 = vector.load %arg4[%c0_5, %c0_6] : memref<3x5xf32, #tpu.memory_space<vmem>>, vector<3x5xf32>
    tpu.vector_store %arg4[%c0_5, %c0_6], %5 {strides = array<i32>} : memref<3x5xf32, #tpu.memory_space<vmem>>, vector<3x5xf32>,
    return
  }
  func.func @transform_0(%arg0: i32) -> (i32, i32) {
    %c0_i32 = arith.constant 0 : i32
    %c0_i32_0 = arith.constant 0 : i32
    %c0_i32_1 = arith.constant 0 : i32
    return %c0_i32, %c0_i32_0 : i32, i32
  }
  func.func @transform_1(%arg0: i32) -> (i32, i32) {
    %c0_i32 = arith.constant 0 : i32
    %c0_i32_0 = arith.constant 0 : i32
    %c0_i32_1 = arith.constant 0 : i32
    return %c0_i32, %c0_i32_0 : i32, i32
  }
  func.func @transform_2(%arg0: i32) -> (i32, i32) {
    %c0_i32 = arith.constant 0 : i32
    %c0_i32_0 = arith.constant 0 : i32
    %c0_i32_1 = arith.constant 0 : i32
    return %c0_i32, %c0_i32_0 : i32, i32
  }
  func.func @transform_3(%arg0: i32) -> (i32, i32) {
    %c0_i32 = arith.constant 0 : i32
    %c0_i32_0 = arith.constant 0 : i32
    %c0_i32_1 = arith.constant 0 : i32
    return %c0_i32, %c0_i32_0 : i32, i32
  }
}

</mosaic_0001>

<llo_original>
// kernel: tpu_custom_call.1
$region0: #{tpu_custom_call.1}
  #allocation0 [shape = 'u32[]', space=smem, size = 0x4, offset = 0x4, fixed_abs, tag = 'smem constant byte address 0x4 - core index']
  #allocation1 [shape = 'u32[144,128]{1,0:T(1,128)}', space=vmem, size = 0x12000, scoped, tag = 'internal scratch']
  %s0 = inlined_call_operand.vmem [shape: bf16[3,64], index: 0, kind: input, shape index: {}]
  %s1 = inlined_call_operand.vmem [shape: bf16[64,5], index: 1, kind: input, shape index: {}]
  %s2 = inlined_call_operand.vmem [shape: f32[1,5], index: 2, kind: input, shape index: {}]
  %s3 = inlined_call_operand.hbm [shape: f32[3,5], index: 3, kind: output, shape index: {}]
  %s4 = sld [smem:[#allocation0]]
  $region22: #{tpu_custom_call.1} parent=0
    _
  %s6 = ssub.s32 1, %s4
  %s7 = scalar_select 0, %s6, %s4
  $region1: #{tpu_custom_call.1} parent=0
    #allocation2 [shape = 'u8[2048]{0}', space=vmem, size = 0x800, scoped, tag = 'output window, operand 0, single buffered']
    #allocation3 [shape = 's32[1]{0}', space=sflag, size = 0x4, scoped, tag = 'scoped memory for tpu_custom_call.1']
    %8 = vsyncpa [#allocation3], 0
    // Predicated region
    $region2: #{tpu_custom_call.1} parent=1 // pred_check
      _
    $region3: #{tpu_custom_call.1} parent=1 // pred_check_branch
      %10 = sbr.rel (0) target = $region5
    $region4: #{tpu_custom_call.1} parent=1 // pred_region
      _
    $region5: #{tpu_custom_call.1} parent=1 // pred_fallthru
      _
    // Predicated region
    $region6: #{tpu_custom_call.1} parent=1 // pred_check
      _
    $region7: #{tpu_custom_call.1} parent=1 // pred_check_branch
      %12 = sbr.rel (0) target = $region9
    $region8: #{tpu_custom_call.1} parent=1 // pred_region
      _
    $region9: #{tpu_custom_call.1} parent=1 // pred_fallthru
      _
    // Predicated region
    $region10: #{tpu_custom_call.1} parent=1 // pred_check
      _
    $region11: #{tpu_custom_call.1} parent=1 // pred_check_branch
      %14 = sbr.rel (0) target = $region13
    $region12: #{tpu_custom_call.1} parent=1 // pred_region
      _
    $region13: #{tpu_custom_call.1} parent=1 // pred_fallthru
      _
    %v16 = vld [vmem:[%s0] sm:$0x3]
    %v17 = vld [vmem:[%s1] sm:$0xf]
    %v18 = vld [vmem:[%s1 + $0x4] sm:$0xf]
    %v19 = vld [vmem:[%s1 + $0x8] sm:$0xf]
    %v20 = vld [vmem:[%s1 + $0xc] sm:$0xf]
    %v21 = vld [vmem:[%s1 + $0x10] sm:$0xf]
    %v22 = vld [vmem:[%s1 + $0x14] sm:$0xf]
    %v23 = vld [vmem:[%s1 + $0x18] sm:$0xf]
    %v24 = vld [vmem:[%s1 + $0x1c] sm:$0xf]
    %v25 = vld [vmem:[%s2] sm:$0x1]
    %v27 = vlaneseq
    %v28 = vshrl.u32 %v27, 7
    %v29 = vsub.s32 0, %v28
    %v30 = vrot.slane %v25, %v29
    %v40 = vunpack.c.l.b16 %v17
    %v41 = vunpack.c.l.b16 %v18
    %v42 = vunpack.c.l.b16 %v19
    %v43 = vunpack.c.l.b16 %v20
    %v44 = vunpack.c.l.b16 %v21
    %v45 = vunpack.c.l.b16 %v22
    %v46 = vunpack.c.l.b16 %v23
    %v47 = vunpack.c.l.b16 %v24
    %v48 = vpack.c.b16 %v41, %v40
    %v49 = vpack.c.b16 %v43, %v42
    %v50 = vpack.c.b16 %v45, %v44
    %v51 = vpack.c.b16 %v47, %v46
    %vm56 = vcmask 523264
    %v58 = vsel %vm56, %v16, 0
    %60 = vmatprep.subr.bf16.mxu0 0
    %61 = vmatpush1.bf16.msra.mxu0 %v48
    %62 = vmatprep.subr.bf16.mxu0 0
    %63 = vmatpush1.bf16.msra.mxu0 %v49
    %64 = vmatprep.subr.bf16.mxu0 0
    %65 = vmatpush1.bf16.msra.mxu0 %v50
    %66 = vmatprep.subr.bf16.mxu0 0
    %67 = vmatpush1.bf16.msra.mxu0 %v51
    %68 = vmatprep.subr.bf16.mxu0 0
    %69 = vmatpush1.bf16.msra.mxu0 0
    %70 = vmatprep.subr.bf16.mxu0 0
    %71 = vmatpush1.bf16.msra.mxu0 0
    %72 = vmatprep.subr.bf16.mxu0 0
    %73 = vmatpush1.bf16.msra.mxu0 0
    %74 = vmatprep.subr.bf16.mxu0 0
    %75 = vmatpush1.bf16.msra.mxu0 0
    %76 = vmatprep.subr.bf16.mxu0 0
    %77 = vmatpush1.bf16.msra.mxu0 0
    %78 = vmatprep.subr.bf16.mxu0 0
    %79 = vmatpush1.bf16.msra.mxu0 0
    %80 = vmatprep.subr.bf16.mxu0 0
    %81 = vmatpush1.bf16.msra.mxu0 0
    %82 = vmatprep.subr.bf16.mxu0 0
    %83 = vmatpush1.bf16.msra.mxu0 0
    %84 = vmatprep.subr.bf16.mxu0 0
    %85 = vmatpush1.bf16.msra.mxu0 0
    %86 = vmatprep.subr.bf16.mxu0 0
    %87 = vmatpush1.bf16.msra.mxu0 0
    %88 = vmatprep.subr.bf16.mxu0 0
    %89 = vmatpush1.bf16.msra.mxu0 0
    %90 = vmatprep.subr.bf16.mxu0 0
    %91 = vmatpush1.bf16.msra.mxu0 0
    %92 = vmatprep.mubr.bf16.mxu0 0
    %93 = vmatmul.mubr.bf16.gmra.mrb[0].mxu0 %v58
    %v94 = vpop.f32.mrb[0].mxu0
    %v95 = vadd.f32 %v30, %v94
    %v96 = vpop.f32.mrb[0].mxu0
    %v97 = vpop.f32.mrb[0].mxu0
    %v98 = vpop.f32.mrb[0].mxu0
    %99 = vdwg.mxu0
    %vm100 = vcmask 34816
    %101 = vst.msk [vmem:[#allocation2] sm:$0x7] %vm100, %v95
    // Predicated region
    $region14: #{tpu_custom_call.1} parent=1 // pred_check
      _
    $region15: #{tpu_custom_call.1} parent=1 // pred_check_branch
      %103 = sbr.rel (0) target = $region17
    $region16: #{tpu_custom_call.1} parent=1 // pred_region
      %s105 = ssub.s32 64, 64
      %106 = vsyncadd [#allocation3], %s105
      %s108 = sshll.u32 [#allocation2], 4
      %s109 = int_to_ptr.vmem [resolvable:$true] %s108
      %111 = dma.vmem_to_hbm [thread:$0]  %s109, 64, %s3, [#allocation3]
    $region17: #{tpu_custom_call.1} parent=1 // pred_fallthru
      _
    // Predicated region
    $region18: #{tpu_custom_call.1} parent=1 // pred_check
      _
    $region19: #{tpu_custom_call.1} parent=1 // pred_check_branch
      %113 = sbr.rel (0) target = $region21
    $region20: #{tpu_custom_call.1} parent=1 // pred_region
      %114 = dma.done [#allocation3], 64
    $region21: #{tpu_custom_call.1} parent=1 // pred_fallthru
      _
    %115 = vsyncpa [#allocation3], 1

</llo_original>
